<compile_context>
chip_gen: v5e
topology: v5e:2x2
jax: 0.10.0
libtpu: 0.0.40
codegen_flags: <defaults>
</compile_context>

<pallas_src>
import functools

import jax
import jax.numpy as jnp
from jax import lax
from jax.experimental import pallas as pl
from jax.experimental.pallas import tpu as pltpu

HIDDEN = 64      # hidden width of the module
HID_PAD = 128    # hidden padded to full lane width
OUT_PAD = 128    # lane-dense head width: cols 0..A-1 = adv+value, col A = value


def _round_up(x, m):
    return ((x + m - 1) // m) * m


def dueling_kernel(x_ref, w1_ref, b1_ref, w2_ref, b2_ref, wh_ref, bh_ref,
                   out_ref, psum_ref, *, state_dim, batch, tile_b):
    tile = pl.program_id(0)

    # --- fc1 on the VPU: K = state_dim is tiny, so a broadcast-FMA loop beats
    #     an MXU matmul that would waste 124/128 of its contraction dim. ---
    x = x_ref[...].astype(jnp.float32)                    # (tile_b, state_dim)
    w1 = w1_ref[...]                                      # (k8, HID_PAD) f32
    h1 = b1_ref[...] + x[:, 0:1] * w1[0:1, :]
    for k in range(1, state_dim):                         # static unroll (tiny)
        h1 = h1 + x[:, k:k + 1] * w1[k:k + 1, :]
    h1 = jnp.maximum(h1, 0.0)

    # --- fc2 -> relu -> fused head on the MXU (f32 accumulation). ---
    h2 = jnp.dot(h1.astype(jnp.bfloat16), w2_ref[...],
                 preferred_element_type=jnp.float32) + b2_ref[...]
    h2 = jnp.maximum(h2, 0.0)
    head = jnp.dot(h2.astype(jnp.bfloat16), wh_ref[...],
                   preferred_element_type=jnp.float32) + bh_ref[...]
    # head[:, :A]  = advantage + value (value folded into every adv column)
    # head[:, A]   = value (kept for global-mean bookkeeping)
    # head[:, A+1:] = exactly 0.

    out_ref[...] = head.astype(out_ref.dtype)             # lane-dense bf16 store

    # Per-tile f32 column partial sums over VALID batch rows (partial last
    # block may contain garbage padding rows -> mask them).
    rows = lax.broadcasted_iota(jnp.int32, head.shape, 0) + tile * tile_b
    colsum = jnp.sum(jnp.where(rows < batch, head, 0.0), axis=0, keepdims=True)
    psum_ref[...] = jnp.broadcast_to(colsum, psum_ref.shape)


def dueling_forward(x, packed, action_dim, *, tile_b=None):
    """x: [B, state_dim] float32. packed: dict from pack_params(). Returns f32 [B, A]."""
    x = x.astype(jnp.float32)
    B, state_dim = x.shape
    assert action_dim + 1 <= OUT_PAD
    assert state_dim <= 32, "fc1 uses a VPU FMA loop; expects a small state_dim"

    if tile_b is None:
        tile_b = 2048
    tile_b = _round_up(max(8, min(tile_b, B)), 8)
    nb = pl.cdiv(B, tile_b)

    kernel = functools.partial(dueling_kernel, state_dim=state_dim,
                               batch=B, tile_b=tile_b)
    const = lambda a: pl.BlockSpec(a.shape, lambda i: (0, 0))   # VMEM-resident

    head, psums = pl.pallas_call(
        kernel,
        out_shape=(
            jax.ShapeDtypeStruct((B, OUT_PAD), jnp.bfloat16),      # uncorrected head
            jax.ShapeDtypeStruct((nb * 8, OUT_PAD), jnp.float32),  # per-tile col sums
        ),
        grid=(nb,),
        in_specs=[
            pl.BlockSpec((tile_b, state_dim), lambda i: (i, 0)),   # x batch tile (unpadded)
            const(packed["w1"]), const(packed["b1"]),              # fc1 (f32, VPU path)
            const(packed["w2"]), const(packed["b2"]),              # fc2 (bf16 / f32 bias)
            const(packed["wh"]), const(packed["bh"]),              # fused head
        ],
        out_specs=(
            pl.BlockSpec((tile_b, OUT_PAD), lambda i: (i, 0)),
            pl.BlockSpec((8, OUT_PAD), lambda i: (i, 0)),
        ),
        compiler_params=pltpu.CompilerParams(
            # Tiles are fully independent -> batch axis parallel (megacore on v7x).
            dimension_semantics=("parallel",)),
    )(x, packed["w1"], packed["b1"], packed["w2"], packed["b2"],
      packed["wh"], packed["bh"])

    # Global advantage mean applied outside the kernel (trivial elementwise op).
    # head[:, j<A] = a_j + v and head[:, A] = v, so sum(a) = sum_j<A colsum - A*sum(v).
    colsum = psums.reshape(nb, 8, OUT_PAD)[:, 0, :].sum(axis=0)      # (OUT_PAD,) f32
    adv_sum = jnp.sum(colsum[:action_dim]) - action_dim * colsum[action_dim]
    mean = adv_sum / jnp.float32(B * action_dim)
    return head[:, :action_dim].astype(jnp.float32) - mean


def init_params(key, state_dim, action_dim, hidden=HIDDEN):
    """PyTorch-layout params (w: [out, in], b: [out]) mimicking
    nn.Linear.reset_parameters(): uniform(-1/sqrt(fan_in), 1/sqrt(fan_in))."""
    def linear(k, fan_in, fan_out):
        kw, kb = jax.random.split(k)
        bound = 1.0 / (fan_in ** 0.5)
        w = jax.random.uniform(kw, (fan_out, fan_in), jnp.float32, -bound, bound)
        b = jax.random.uniform(kb, (fan_out,), jnp.float32, -bound, bound)
        return w, b

    k1, k2, k3, k4 = jax.random.split(key, 4)
    w1, b1 = linear(k1, state_dim, hidden)
    w2, b2 = linear(k2, hidden, hidden)
    wv, bv = linear(k3, hidden, 1)
    wa, ba = linear(k4, hidden, action_dim)
    return dict(w1=w1, b1=b1, w2=w2, b2=b2, wv=wv, bv=bv, wa=wa, ba=ba)


def pack_params(p, state_dim, action_dim):
    """Repack PyTorch-layout f32 params into kernel-ready tensors:
      * fc1 weight kept in f32, transposed to [in, out], rows padded to 8 (VPU path);
      * fc2 / head weights transposed, zero-padded to 128x128 tiles, cast to bf16;
      * value head folded into EVERY advantage column (wh[:, j<A] = wa_j + wv,
        bh[j<A] = ba_j + bv) so head[:, :A] is already value+advantage; the raw
        value is kept in column A only for the global-mean bookkeeping;
      * biases stay f32 as [1, 128] rows."""
    A = action_dim
    k8 = _round_up(max(state_dim, 1), 8)
    w1 = jnp.zeros((k8, HID_PAD), jnp.float32).at[:state_dim, :HIDDEN].set(p["w1"].T)
    b1 = jnp.zeros((1, HID_PAD), jnp.float32).at[0, :HIDDEN].set(p["b1"])
    w2 = jnp.zeros((HID_PAD, HID_PAD), jnp.float32).at[:HIDDEN, :HIDDEN].set(p["w2"].T)
    b2 = jnp.zeros((1, HID_PAD), jnp.float32).at[0, :HIDDEN].set(p["b2"])
    wh = (jnp.zeros((HID_PAD, OUT_PAD), jnp.float32)
          .at[:HIDDEN, :A].set(p["wa"].T + p["wv"].T)     # value folded into adv cols
          .at[:HIDDEN, A].set(p["wv"][0]))
    bh = (jnp.zeros((1, OUT_PAD), jnp.float32)
          .at[0, :A].set(p["ba"] + p["bv"][0])
          .at[0, A].set(p["bv"][0]))
    return dict(w1=w1, b1=b1,
                w2=w2.astype(jnp.bfloat16), b2=b2,
                wh=wh.astype(jnp.bfloat16), bh=bh)


def reference_forward(x, p):
    """Exact f32 PyTorch forward semantics: q = v + (a - a.mean()) with the
    GLOBAL mean over the whole [B, A] advantage tensor."""
    h1 = jnp.maximum(x @ p["w1"].T + p["b1"], 0.0)
    h2 = jnp.maximum(h1 @ p["w2"].T + p["b2"], 0.0)
    v = h2 @ p["wv"].T + p["bv"]
    a = h2 @ p["wa"].T + p["ba"]
    return v + (a - jnp.mean(a))


if __name__ == "__main__":
    key = jax.random.PRNGKey(0)
    k_x, k_x2, k_p = jax.random.split(key, 3)

    STATE_DIM, ACTION_DIM = 4, 8
    params = init_params(k_p, STATE_DIM, ACTION_DIM)
    packed = pack_params(params, STATE_DIM, ACTION_DIM)

    # Small case consistent with the module (batch=2) -> single grid step.
    B = 2
    x = jax.random.normal(k_x, (B, STATE_DIM), jnp.float32)
    q = jax.block_until_ready(dueling_forward(x, packed, ACTION_DIM))
    q_ref = reference_forward(x, params)
    assert q.shape == (B, ACTION_DIM)
    # bf16 weights/activations + bf16 output store vs all-f32 reference.
    assert jnp.allclose(q, q_ref, atol=5e-2, rtol=5e-2), "mismatch vs reference (B=2)"

    # Multi-tile case: 37 rows, tile_b=16 -> 3 tiles, partial last block
    # (exercises the row mask, the cross-tile global-mean partial sums and the
    # parallel batch-tile axis).
    B2 = 37
    x2 = jax.random.normal(k_x2, (B2, STATE_DIM), jnp.float32)
    q2 = jax.block_until_ready(dueling_forward(x2, packed, ACTION_DIM, tile_b=16))
    q2_ref = reference_forward(x2, params)
    assert q2.shape == (B2, ACTION_DIM)
    assert jnp.allclose(q2, q2_ref, atol=5e-2, rtol=5e-2), "mismatch vs reference (tiled)"

    print("KERNEL_OK")
</pallas_src>

<mosaic_0001>
module attributes {stable_mosaic.version = 11 : i64} {
  func.func @dueling_kernel(%arg0: i32, %arg1: memref<8x4xf32, #tpu.memory_space<vmem>>, %arg2: memref<8x128xf32, #tpu.memory_space<vmem>>, %arg3: memref<1x128xf32, #tpu.memory_space<vmem>>, %arg4: memref<128x128xbf16, #tpu.memory_space<vmem>>, %arg5: memref<1x128xf32, #tpu.memory_space<vmem>>, %arg6: memref<128x128xbf16, #tpu.memory_space<vmem>>, %arg7: memref<1x128xf32, #tpu.memory_space<vmem>>, %arg8: memref<8x128xbf16, #tpu.memory_space<vmem>>, %arg9: memref<8x128xf32, #tpu.memory_space<vmem>>) attributes {dimension_semantics = [#tpu.dimension_semantics<parallel>], iteration_bounds = array<i64: 1>, scalar_prefetch = 0 : i64, scratch_operands = 0 : i64, tpu.core_type = #tpu.core_type<tc>, window_params = [{transform_indices = @transform_0, window_bounds = array<i64: 8, 4>}, {pipeline_mode = #tpu.pipeline_mode<synchronous>, transform_indices = @transform_1, window_bounds = array<i64: 8, 128>}, {pipeline_mode = #tpu.pipeline_mode<synchronous>, transform_indices = @transform_2, window_bounds = array<i64: 1, 128>}, {pipeline_mode = #tpu.pipeline_mode<synchronous>, transform_indices = @transform_3, window_bounds = array<i64: 128, 128>}, {pipeline_mode = #tpu.pipeline_mode<synchronous>, transform_indices = @transform_4, window_bounds = array<i64: 1, 128>}, {pipeline_mode = #tpu.pipeline_mode<synchronous>, transform_indices = @transform_5, window_bounds = array<i64: 128, 128>}, {pipeline_mode = #tpu.pipeline_mode<synchronous>, transform_indices = @transform_6, window_bounds = array<i64: 1, 128>}, {transform_indices = @transform_7, window_bounds = array<i64: 8, 128>}, {transform_indices = @transform_8, window_bounds = array<i64: 8, 128>}]} {
    %c0 = arith.constant 0 : index
    %c0_0 = arith.constant 0 : index
    %0 = vector.load %arg1[%c0, %c0_0] : memref<8x4xf32, #tpu.memory_space<vmem>>, vector<8x4xf32>
    %c0_1 = arith.constant 0 : index
    %c0_2 = arith.constant 0 : index
    %1 = vector.load %arg2[%c0_1, %c0_2] : memref<8x128xf32, #tpu.memory_space<vmem>>, vector<8x128xf32>
    %c0_3 = arith.constant 0 : index
    %c0_4 = arith.constant 0 : index
    %2 = vector.load %arg3[%c0_3, %c0_4] : memref<1x128xf32, #tpu.memory_space<vmem>>, vector<1x128xf32>
    %3 = vector.extract_strided_slice %0 {offsets = [0, 0], sizes = [8, 1], strides = [1, 1]} : vector<8x4xf32> to vector<8x1xf32>
    %4 = vector.extract_strided_slice %1 {offsets = [0, 0], sizes = [1, 128], strides = [1, 1]} : vector<8x128xf32> to vector<1x128xf32>
    %5 = vector.broadcast %3 : vector<8x1xf32> to vector<8x128xf32>
    %6 = vector.broadcast %4 : vector<1x128xf32> to vector<8x128xf32>
    %7 = arith.mulf %5, %6 : vector<8x128xf32>
    %8 = vector.broadcast %2 : vector<1x128xf32> to vector<8x128xf32>
    %9 = arith.addf %8, %7 : vector<8x128xf32>
    %10 = vector.extract_strided_slice %0 {offsets = [0, 1], sizes = [8, 1], strides = [1, 1]} : vector<8x4xf32> to vector<8x1xf32>
    %11 = vector.extract_strided_slice %1 {offsets = [1, 0], sizes = [1, 128], strides = [1, 1]} : vector<8x128xf32> to vector<1x128xf32>
    %12 = vector.broadcast %10 : vector<8x1xf32> to vector<8x128xf32>
    %13 = vector.broadcast %11 : vector<1x128xf32> to vector<8x128xf32>
    %14 = arith.mulf %12, %13 : vector<8x128xf32>
    %15 = arith.addf %9, %14 : vector<8x128xf32>
    %16 = vector.extract_strided_slice %0 {offsets = [0, 2], sizes = [8, 1], strides = [1, 1]} : vector<8x4xf32> to vector<8x1xf32>
    %17 = vector.extract_strided_slice %1 {offsets = [2, 0], sizes = [1, 128], strides = [1, 1]} : vector<8x128xf32> to vector<1x128xf32>
    %18 = vector.broadcast %16 : vector<8x1xf32> to vector<8x128xf32>
    %19 = vector.broadcast %17 : vector<1x128xf32> to vector<8x128xf32>
    %20 = arith.mulf %18, %19 : vector<8x128xf32>
    %21 = arith.addf %15, %20 : vector<8x128xf32>
    %22 = vector.extract_strided_slice %0 {offsets = [0, 3], sizes = [8, 1], strides = [1, 1]} : vector<8x4xf32> to vector<8x1xf32>
    %23 = vector.extract_strided_slice %1 {offsets = [3, 0], sizes = [1, 128], strides = [1, 1]} : vector<8x128xf32> to vector<1x128xf32>
    %24 = vector.broadcast %22 : vector<8x1xf32> to vector<8x128xf32>
    %25 = vector.broadcast %23 : vector<1x128xf32> to vector<8x128xf32>
    %26 = arith.mulf %24, %25 : vector<8x128xf32>
    %27 = arith.addf %21, %26 : vector<8x128xf32>
    %cst = arith.constant 0.000000e+00 : f32
    %28 = vector.broadcast %cst : f32 to vector<8x128xf32>
    %29 = arith.maximumf %27, %28 : vector<8x128xf32>
    %30 = arith.truncf %29 : vector<8x128xf32> to vector<8x128xbf16>
    %c0_5 = arith.constant 0 : index
    %c0_6 = arith.constant 0 : index
    %31 = vector.load %arg4[%c0_5, %c0_6] : memref<128x128xbf16, #tpu.memory_space<vmem>>, vector<128x128xbf16>
    %cst_7 = arith.constant dense<0.000000e+00> : vector<8x128xf32>
    %32 = tpu.matmul %30, %31, %cst_7 {dimension_numbers = #tpu.dot_dimension_numbers<[1], [0], [0], [1], [0, 0, 1, 1], [], []>} : vector<8x128xbf16>, vector<128x128xbf16>, vector<8x128xf32> -> vector<8x128xf32>
    %c0_8 = arith.constant 0 : index
    %c0_9 = arith.constant 0 : index
    %33 = vector.load %arg5[%c0_8, %c0_9] : memref<1x128xf32, #tpu.memory_space<vmem>>, vector<1x128xf32>
    %34 = vector.broadcast %33 : vector<1x128xf32> to vector<8x128xf32>
    %35 = arith.addf %32, %34 : vector<8x128xf32>
    %cst_10 = arith.constant 0.000000e+00 : f32
    %36 = vector.broadcast %cst_10 : f32 to vector<8x128xf32>
    %37 = arith.maximumf %35, %36 : vector<8x128xf32>
    %38 = arith.truncf %37 : vector<8x128xf32> to vector<8x128xbf16>
    %c0_11 = arith.constant 0 : index
    %c0_12 = arith.constant 0 : index
    %39 = vector.load %arg6[%c0_11, %c0_12] : memref<128x128xbf16, #tpu.memory_space<vmem>>, vector<128x128xbf16>
    %cst_13 = arith.constant dense<0.000000e+00> : vector<8x128xf32>
    %40 = tpu.matmul %38, %39, %cst_13 {dimension_numbers = #tpu.dot_dimension_numbers<[1], [0], [0], [1], [0, 0, 1, 1], [], []>} : vector<8x128xbf16>, vector<128x128xbf16>, vector<8x128xf32> -> vector<8x128xf32>
    %c0_14 = arith.constant 0 : index
    %c0_15 = arith.constant 0 : index
    %41 = vector.load %arg7[%c0_14, %c0_15] : memref<1x128xf32, #tpu.memory_space<vmem>>, vector<1x128xf32>
    %42 = vector.broadcast %41 : vector<1x128xf32> to vector<8x128xf32>
    %43 = arith.addf %40, %42 : vector<8x128xf32>
    %44 = arith.truncf %43 : vector<8x128xf32> to vector<8x128xbf16>
    %c0_16 = arith.constant 0 : index
    %c0_17 = arith.constant 0 : index
    %45 = vector.load %arg8[%c0_16, %c0_17] : memref<8x128xbf16, #tpu.memory_space<vmem>>, vector<8x128xbf16>
    tpu.vector_store %arg8[%c0_16, %c0_17], %44 {strides = array<i32>} : memref<8x128xbf16, #tpu.memory_space<vmem>>, vector<8x128xbf16>,
    %46 = tpu.iota {dimensions = array<i32: 0>} : vector<8x128xi32>
    %c8_i32 = arith.constant 8 : i32
    %47 = arith.muli %arg0, %c8_i32 : i32
    %48 = vector.broadcast %47 : i32 to vector<8x128xi32>
    %49 = arith.addi %46, %48 : vector<8x128xi32>
    %c2_i32 = arith.constant 2 : i32
    %50 = vector.broadcast %c2_i32 : i32 to vector<8x128xi32>
    %51 = arith.cmpi slt, %49, %50 : vector<8x128xi32>
    %cst_18 = arith.constant 0.000000e+00 : f32
    %52 = vector.broadcast %cst_18 : f32 to vector<8x128xf32>
    %53 = arith.select %51, %43, %52 : vector<8x128xi1>, vector<8x128xf32>
    %cst_19 = arith.constant dense<0.000000e+00> : vector<128xf32>
    %54 = vector.multi_reduction <add>, %53, %cst_19 [0] : vector<8x128xf32> to vector<128xf32>
    %55 = vector.shape_cast %54 : vector<128xf32> to vector<1x128xf32>
    %56 = vector.shape_cast %55 : vector<1x128xf32> to vector<1x128xf32>
    %57 = vector.broadcast %56 : vector<1x128xf32> to vector<8x128xf32>
    %c0_20 = arith.constant 0 : index
    %c0_21 = arith.constant 0 : index
    %58 = vector.load %arg9[%c0_20, %c0_21] : memref<8x128xf32, #tpu.memory_space<vmem>>, vector<8x128xf32>
    tpu.vector_store %arg9[%c0_20, %c0_21], %57 {strides = array<i32>} : memref<8x128xf32, #tpu.memory_space<vmem>>, vector<8x128xf32>,
    return
  }
  func.func @transform_0(%arg0: i32) -> (i32, i32) {
    %c0_i32 = arith.constant 0 : i32
    %c0_i32_0 = arith.constant 0 : i32
    return %arg0, %c0_i32 : i32, i32
  }
  func.func @transform_1(%arg0: i32) -> (i32, i32) {
    %c0_i32 = arith.constant 0 : i32
    %c0_i32_0 = arith.constant 0 : i32
    %c0_i32_1 = arith.constant 0 : i32
    return %c0_i32, %c0_i32_0 : i32, i32
  }
  func.func @transform_2(%arg0: i32) -> (i32, i32) {
    %c0_i32 = arith.constant 0 : i32
    %c0_i32_0 = arith.constant 0 : i32
    %c0_i32_1 = arith.constant 0 : i32
    return %c0_i32, %c0_i32_0 : i32, i32
  }
  func.func @transform_3(%arg0: i32) -> (i32, i32) {
    %c0_i32 = arith.constant 0 : i32
    %c0_i32_0 = arith.constant 0 : i32
    %c0_i32_1 = arith.constant 0 : i32
    return %c0_i32, %c0_i32_0 : i32, i32
  }
  func.func @transform_4(%arg0: i32) -> (i32, i32) {
    %c0_i32 = arith.constant 0 : i32
    %c0_i32_0 = arith.constant 0 : i32
    %c0_i32_1 = arith.constant 0 : i32
    return %c0_i32, %c0_i32_0 : i32, i32
  }
  func.func @transform_5(%arg0: i32) -> (i32, i32) {
    %c0_i32 = arith.constant 0 : i32
    %c0_i32_0 = arith.constant 0 : i32
    %c0_i32_1 = arith.constant 0 : i32
    return %c0_i32, %c0_i32_0 : i32, i32
  }
  func.func @transform_6(%arg0: i32) -> (i32, i32) {
    %c0_i32 = arith.constant 0 : i32
    %c0_i32_0 = arith.constant 0 : i32
    %c0_i32_1 = arith.constant 0 : i32
    return %c0_i32, %c0_i32_0 : i32, i32
  }
  func.func @transform_7(%arg0: i32) -> (i32, i32) {
    %c0_i32 = arith.constant 0 : i32
    %c0_i32_0 = arith.constant 0 : i32
    return %arg0, %c0_i32 : i32, i32
  }
  func.func @transform_8(%arg0: i32) -> (i32, i32) {
    %c0_i32 = arith.constant 0 : i32
    %c0_i32_0 = arith.constant 0 : i32
    return %arg0, %c0_i32 : i32, i32
  }
}

</mosaic_0001>

<llo_original>
// kernel: tpu_custom_call.1
$region0: #{tpu_custom_call.1}
  #allocation0 [shape = 'u32[]', space=smem, size = 0x4, offset = 0x4, fixed_abs, tag = 'smem constant byte address 0x4 - core index']
  #allocation1 [shape = 'u32[72,128]{1,0:T(1,128)}', space=vmem, size = 0x9000, scoped, tag = 'internal scratch']
  %s0 = inlined_call_operand.hbm [shape: f32[2,4], index: 0, kind: input, shape index: {}]
  %s1 = inlined_call_operand.hbm [shape: f32[8,128], index: 1, kind: input, shape index: {}]
  %s2 = inlined_call_operand.vmem [shape: f32[1,128], index: 2, kind: input, shape index: {}]
  %s3 = inlined_call_operand.hbm [shape: bf16[128,128], index: 3, kind: input, shape index: {}]
  %s4 = inlined_call_operand.vmem [shape: f32[1,128], index: 4, kind: input, shape index: {}]
  %s5 = inlined_call_operand.hbm [shape: bf16[128,128], index: 5, kind: input, shape index: {}]
  %s6 = inlined_call_operand.vmem [shape: f32[1,128], index: 6, kind: input, shape index: {}]
  %s7 = inlined_call_operand.hbm [shape: bf16[2,128], index: 7, kind: output, shape index: {0}]
  %s8 = inlined_call_operand.hbm [shape: f32[8,128], index: 8, kind: output, shape index: {1}]
  %9 = xla_tuple %s7, %s8
  %s10 = sld [smem:[#allocation0]]
  $region62: #{tpu_custom_call.1} parent=0
    _
  %s12 = ssub.s32 1, %s10
  %s13 = scalar_select 0, %s12, %s10
  $region1: #{tpu_custom_call.1} parent=0
    #allocation2 [shape = 'u8[4096]{0}', space=vmem, size = 0x1000, scoped, tag = 'input window, operand 0, single buffered']
    #allocation3 [shape = 's32[1]{0}', space=sflag, size = 0x4, scoped, tag = 'scoped memory for tpu_custom_call.1']
    #allocation4 [shape = 's32[1]{0}', space=sflag, size = 0x4, scoped, tag = 'scoped memory for tpu_custom_call.1']
    #allocation5 [shape = 'u8[4096]{0}', space=vmem, size = 0x1000, scoped, tag = 'input window, operand 1, single buffered']
    #allocation6 [shape = 's32[1]{0}', space=sflag, size = 0x4, scoped, tag = 'scoped memory for tpu_custom_call.1']
    #allocation7 [shape = 'u8[32768]{0}', space=vmem, size = 0x8000, scoped, tag = 'input window, operand 3, single buffered']
    #allocation8 [shape = 'u8[32768]{0}', space=vmem, size = 0x8000, scoped, tag = 'input window, operand 5, single buffered']
    #allocation9 [shape = 's32[1]{0}', space=sflag, size = 0x4, scoped, tag = 'scoped memory for tpu_custom_call.1']
    #allocation10 [shape = 'u8[2048]{0}', space=vmem, size = 0x800, scoped, tag = 'output window, operand 0, single buffered']
    #allocation11 [shape = 'u8[4096]{0}', space=vmem, size = 0x1000, scoped, tag = 'output window, operand 1, single buffered']
    #allocation12 [shape = 's32[1]{0}', space=sflag, size = 0x4, scoped, tag = 'scoped memory for tpu_custom_call.1']
    %14 = vsyncpa [#allocation3], 0
    %15 = vsyncpa [#allocation6], 0
    %16 = vsyncpa [#allocation9], 0
    %17 = vsyncpa [#allocation4], 0
    %18 = vsyncpa [#allocation12], 0
    // Predicated region
    $region2: #{tpu_custom_call.1} parent=1 // pred_check
      _
    $region3: #{tpu_custom_call.1} parent=1 // pred_check_branch
      %20 = sbr.rel (0) target = $region5
    $region4: #{tpu_custom_call.1} parent=1 // pred_region
      %22 = vsyncadd [#allocation3], 96
      %s23 = sshll.u32 %s0, 4
      %s24 = int_to_ptr.hbm [resolvable:$true] %s23
      %s25 = sshll.u32 [#allocation2], 4
      %s26 = int_to_ptr.vmem [resolvable:$true] %s25
      %31 = dma.hbm_to_vmem [thread:$0]  %s24, 32, %s26, [#allocation3], 32, 32, 2
    $region5: #{tpu_custom_call.1} parent=1 // pred_fallthru
      _
    // Predicated region
    $region6: #{tpu_custom_call.1} parent=1 // pred_check
      _
    $region7: #{tpu_custom_call.1} parent=1 // pred_check_branch
      %33 = sbr.rel (0) target = $region9
    $region8: #{tpu_custom_call.1} parent=1 // pred_region
      %35 = vsyncadd [#allocation6], 0
      %s37 = sshll.u32 %s1, 4
      %s38 = int_to_ptr.hbm [resolvable:$true] %s37
      %s39 = sshll.u32 [#allocation5], 4
      %s40 = int_to_ptr.vmem [resolvable:$true] %s39
      %42 = dma.hbm_to_vmem [thread:$0]  %s38, 128, %s40, [#allocation6]
    $region9: #{tpu_custom_call.1} parent=1 // pred_fallthru
      _
    // Predicated region
    $region10: #{tpu_custom_call.1} parent=1 // pred_check
      _
    $region11: #{tpu_custom_call.1} parent=1 // pred_check_branch
      %44 = sbr.rel (0) target = $region13
    $region12: #{tpu_custom_call.1} parent=1 // pred_region
      _
    $region13: #{tpu_custom_call.1} parent=1 // pred_fallthru
      _
    // Predicated region
    $region14: #{tpu_custom_call.1} parent=1 // pred_check
      _
    $region15: #{tpu_custom_call.1} parent=1 // pred_check_branch
      %46 = sbr.rel (0) target = $region17
    $region16: #{tpu_custom_call.1} parent=1 // pred_region
      %48 = vsyncadd [#allocation6], 0
      %s49 = sshll.u32 %s3, 4
      %s50 = int_to_ptr.hbm [resolvable:$true] %s49
      %s51 = sshll.u32 [#allocation7], 4
      %s52 = int_to_ptr.vmem [resolvable:$true] %s51
      %57 = dma.hbm_to_vmem [thread:$0]  %s50, 1024, %s52, [#allocation6], 64, 64, 4
    $region17: #{tpu_custom_call.1} parent=1 // pred_fallthru
      _
    // Predicated region
    $region18: #{tpu_custom_call.1} parent=1 // pred_check
      _
    $region19: #{tpu_custom_call.1} parent=1 // pred_check_branch
      %59 = sbr.rel (0) target = $region21
    $region20: #{tpu_custom_call.1} parent=1 // pred_region
      _
    $region21: #{tpu_custom_call.1} parent=1 // pred_fallthru
      _
    // Predicated region
    $region22: #{tpu_custom_call.1} parent=1 // pred_check
      _
    $region23: #{tpu_custom_call.1} parent=1 // pred_check_branch
      %61 = sbr.rel (0) target = $region25
    $region24: #{tpu_custom_call.1} parent=1 // pred_region
      %63 = vsyncadd [#allocation9], 0
      %s64 = sshll.u32 %s5, 4
      %s65 = int_to_ptr.hbm [resolvable:$true] %s64
      %s66 = sshll.u32 [#allocation8], 4
      %s67 = int_to_ptr.vmem [resolvable:$true] %s66
      %72 = dma.hbm_to_vmem [thread:$0]  %s65, 1024, %s67, [#allocation9], 64, 64, 4
    $region25: #{tpu_custom_call.1} parent=1 // pred_fallthru
      _
    // Predicated region
    $region26: #{tpu_custom_call.1} parent=1 // pred_check
      _
    $region27: #{tpu_custom_call.1} parent=1 // pred_check_branch
      %74 = sbr.rel (0) target = $region29
    $region28: #{tpu_custom_call.1} parent=1 // pred_region
      _
    $region29: #{tpu_custom_call.1} parent=1 // pred_fallthru
      _
    // Predicated region
    $region30: #{tpu_custom_call.1} parent=1 // pred_check
      _
    $region31: #{tpu_custom_call.1} parent=1 // pred_check_branch
      %76 = sbr.rel (0) target = $region33
    $region32: #{tpu_custom_call.1} parent=1 // pred_region
      %78 = dma.done [#allocation3], 128
    $region33: #{tpu_custom_call.1} parent=1 // pred_fallthru
      _
    // Predicated region
    $region34: #{tpu_custom_call.1} parent=1 // pred_check
      _
    $region35: #{tpu_custom_call.1} parent=1 // pred_check_branch
      %80 = sbr.rel (0) target = $region37
    $region36: #{tpu_custom_call.1} parent=1 // pred_region
      %82 = dma.done [#allocation6], 128
    $region37: #{tpu_custom_call.1} parent=1 // pred_fallthru
      _
    // Predicated region
    $region38: #{tpu_custom_call.1} parent=1 // pred_check
      _
    $region39: #{tpu_custom_call.1} parent=1 // pred_check_branch
      %84 = sbr.rel (0) target = $region41
    $region40: #{tpu_custom_call.1} parent=1 // pred_region
      %86 = dma.done [#allocation6], 1024
    $region41: #{tpu_custom_call.1} parent=1 // pred_fallthru
      _
    // Predicated region
    $region42: #{tpu_custom_call.1} parent=1 // pred_check
      _
    $region43: #{tpu_custom_call.1} parent=1 // pred_check_branch
      %88 = sbr.rel (0) target = $region45
    $region44: #{tpu_custom_call.1} parent=1 // pred_region
      %90 = dma.done [#allocation9], 1024
    $region45: #{tpu_custom_call.1} parent=1 // pred_fallthru
      _
    %v91 = vld [vmem:[#allocation2] sm:$0xff]
    %v92 = vld [vmem:[#allocation5] sm:$0xff]
    %v93 = vld [vmem:[%s2] sm:$0x1]
    %95 = vset.pattern.permute.xlu0 0
    %96 = vperm.xlu0 %95, %v91
    %v97 = vpop.permute.xlu0 %96
    %v99 = vperm.slane %v92, 0
    %v100 = vmul.f32 %v97, %v99
    %v102 = vperm.slane %v93, 0
    %v104 = vadd.f32 %v102, %v100
    %105 = vset.pattern.permute.xlu0 1
    %106 = vperm.xlu0 %105, %v91
    %v107 = vpop.permute.xlu0 %106
    %v109 = vperm.slane %v92, 1
    %v110 = vmul.f32 %v107, %v109
    %v111 = vadd.f32 %v104, %v110
    %112 = vset.pattern.permute.xlu0 2
    %113 = vperm.xlu0 %112, %v91
    %v114 = vpop.permute.xlu0 %113
    %v116 = vperm.slane %v92, 2
    %v117 = vmul.f32 %v114, %v116
    %v118 = vadd.f32 %v111, %v117
    %119 = vset.pattern.permute.xlu0 3
    %120 = vperm.xlu0 %119, %v91
    %v121 = vpop.permute.xlu0 %120
    %v123 = vperm.slane %v92, 3
    %v124 = vmul.f32 %v121, %v123
    %v125 = vadd.f32 %v118, %v124
    %v126 = vmax.f32 %v125, 0.0
    %v127 = vpack.c.bf16 %v126, %v126
    %v128 = vld [vmem:[#allocation7] sm:$0xf]
    %v129 = vld [vmem:[#allocation7 + $0x4] sm:$0xf]
    %v130 = vld [vmem:[#allocation7 + $0x8] sm:$0xf]
    %v131 = vld [vmem:[#allocation7 + $0xc] sm:$0xf]
    %v132 = vld [vmem:[#allocation7 + $0x10] sm:$0xf]
    %v133 = vld [vmem:[#allocation7 + $0x14] sm:$0xf]
    %v134 = vld [vmem:[#allocation7 + $0x18] sm:$0xf]
    %v135 = vld [vmem:[#allocation7 + $0x1c] sm:$0xf]
    %v136 = vld [vmem:[#allocation7 + $0x20] sm:$0xf]
    %v137 = vld [vmem:[#allocation7 + $0x24] sm:$0xf]
    %v138 = vld [vmem:[#allocation7 + $0x28] sm:$0xf]
    %v139 = vld [vmem:[#allocation7 + $0x2c] sm:$0xf]
    %v140 = vld [vmem:[#allocation7 + $0x30] sm:$0xf]
    %v141 = vld [vmem:[#allocation7 + $0x34] sm:$0xf]
    %v142 = vld [vmem:[#allocation7 + $0x38] sm:$0xf]
    %v143 = vld [vmem:[#allocation7 + $0x3c] sm:$0xf]
    %v144 = vld [vmem:[%s4] sm:$0x1]
    %v146 = vperm.slane %v144, 0
    %v164 = vunpack.c.l.b16 %v128
    %v165 = vunpack.c.l.b16 %v129
    %v166 = vunpack.c.l.b16 %v130
    %v167 = vunpack.c.l.b16 %v131
    %v168 = vunpack.c.l.b16 %v132
    %v169 = vunpack.c.l.b16 %v133
    %v170 = vunpack.c.l.b16 %v134
    %v171 = vunpack.c.l.b16 %v135
    %v172 = vunpack.c.l.b16 %v136
    %v173 = vunpack.c.l.b16 %v137
    %v174 = vunpack.c.l.b16 %v138
    %v175 = vunpack.c.l.b16 %v139
    %v176 = vunpack.c.l.b16 %v140
    %v177 = vunpack.c.l.b16 %v141
    %v178 = vunpack.c.l.b16 %v142
    %v179 = vunpack.c.l.b16 %v143
    %v180 = vpack.c.b16 %v165, %v164
    %v181 = vpack.c.b16 %v167, %v166
    %v182 = vpack.c.b16 %v169, %v168
    %v183 = vpack.c.b16 %v171, %v170
    %v184 = vpack.c.b16 %v173, %v172
    %v185 = vpack.c.b16 %v175, %v174
    %v186 = vpack.c.b16 %v177, %v176
    %v187 = vpack.c.b16 %v179, %v178
    %196 = vmatpush.bf16.msra.mxu0 %v187
    %197 = vmatpush.bf16.msra.mxu0 %v186
    %198 = vmatpush.bf16.msra.mxu0 %v185
    %199 = vmatpush.bf16.msra.mxu0 %v184
    %200 = vmatpush.bf16.msra.mxu0 %v183
    %201 = vmatpush.bf16.msra.mxu0 %v182
    %202 = vmatpush.bf16.msra.mxu0 %v181
    %203 = vmatpush.bf16.msra.mxu0 %v180
    %204 = vmatmul.bf16.gmra.mxu0 %v127
    %v205 = vpop.f32.mrf.mxu0
    %v206 = vadd.f32 %v146, %v205
    %v207 = vpop.f32.mrf.mxu0
    %208 = vdwg.mxu0
    %v209 = vmax.f32 %v206, 0.0
    %v210 = vpack.c.bf16 %v209, %v209
    %v211 = vld [vmem:[#allocation8] sm:$0xf]
    %v212 = vld [vmem:[#allocation8 + $0x4] sm:$0xf]
    %v213 = vld [vmem:[#allocation8 + $0x8] sm:$0xf]
    %v214 = vld [vmem:[#allocation8 + $0xc] sm:$0xf]
    %v215 = vld [vmem:[#allocation8 + $0x10] sm:$0xf]
    %v216 = vld [vmem:[#allocation8 + $0x14] sm:$0xf]
    %v217 = vld [vmem:[#allocation8 + $0x18] sm:$0xf]
    %v218 = vld [vmem:[#allocation8 + $0x1c] sm:$0xf]
    %v219 = vld [vmem:[#allocation8 + $0x20] sm:$0xf]
    %v220 = vld [vmem:[#allocation8 + $0x24] sm:$0xf]
    %v221 = vld [vmem:[#allocation8 + $0x28] sm:$0xf]
    %v222 = vld [vmem:[#allocation8 + $0x2c] sm:$0xf]
    %v223 = vld [vmem:[#allocation8 + $0x30] sm:$0xf]
    %v224 = vld [vmem:[#allocation8 + $0x34] sm:$0xf]
    %v225 = vld [vmem:[#allocation8 + $0x38] sm:$0xf]
    %v226 = vld [vmem:[#allocation8 + $0x3c] sm:$0xf]
    %v227 = vld [vmem:[%s6] sm:$0x1]
    %v229 = vperm.slane %v227, 0
    %v247 = vunpack.c.l.b16 %v211
    %v248 = vunpack.c.l.b16 %v212
    %v249 = vunpack.c.l.b16 %v213
    %v250 = vunpack.c.l.b16 %v214
    %v251 = vunpack.c.l.b16 %v215
    %v252 = vunpack.c.l.b16 %v216
    %v253 = vunpack.c.l.b16 %v217
    %v254 = vunpack.c.l.b16 %v218
    %v255 = vunpack.c.l.b16 %v219
    %v256 = vunpack.c.l.b16 %v220
    %v257 = vunpack.c.l.b16 %v221
    %v258 = vunpack.c.l.b16 %v222
    %v259 = vunpack.c.l.b16 %v223
    %v260 = vunpack.c.l.b16 %v224
    %v261 = vunpack.c.l.b16 %v225
    %v262 = vunpack.c.l.b16 %v226
    %v263 = vpack.c.b16 %v248, %v247
    %v264 = vpack.c.b16 %v250, %v249
    %v265 = vpack.c.b16 %v252, %v251
    %v266 = vpack.c.b16 %v254, %v253
    %v267 = vpack.c.b16 %v256, %v255
    %v268 = vpack.c.b16 %v258, %v257
    %v269 = vpack.c.b16 %v260, %v259
    %v270 = vpack.c.b16 %v262, %v261
    %279 = vmatpush.bf16.msra.mxu0 %v270
    %280 = vmatpush.bf16.msra.mxu0 %v269
    %281 = vmatpush.bf16.msra.mxu0 %v268
    %282 = vmatpush.bf16.msra.mxu0 %v267
    %283 = vmatpush.bf16.msra.mxu0 %v266
    %284 = vmatpush.bf16.msra.mxu0 %v265
    %285 = vmatpush.bf16.msra.mxu0 %v264
    %286 = vmatpush.bf16.msra.mxu0 %v263
    %287 = vmatmul.bf16.gmra.mxu0 %v210
    %v288 = vpop.f32.mrf.mxu0
    %v289 = vadd.f32 %v229, %v288
    %v290 = vpop.f32.mrf.mxu0
    %291 = vdwg.mxu0
    %v292 = vpack.c.bf16 %v289, %v289
    %v294 = vrot.slane %v292, 3
    %vm295 = vcmask 1040384
    %v298 = vsel %vm295, %v292, %v294
    %vm299 = vcmask 1041409
    %v300 = vsel %vm299, %v292, %v294
    %v302 = vrot.slane %v300, 1
    %vm303 = vcmask 1042434
    %v304 = vsel %vm303, %v292, %v294
    %v306 = vrot.slane %v304, 2
    %vm307 = vcmask 1043459
    %v308 = vsel %vm307, %v292, %v294
    %v310 = vrot.slane %v308, 3
    %315 = vst [vmem:[#allocation10] sm:$0x1] %v298
    %316 = vst [vmem:[#allocation10 + $0x1] sm:$0x1] %v302
    %317 = vst [vmem:[#allocation10 + $0x2] sm:$0x1] %v306
    %318 = vst [vmem:[#allocation10 + $0x3] sm:$0x1] %v310
    %v319 = vlaneseq
    %v320 = vshrl.u32 %v319, 7
    %s321 = smul.u32 0, 8
    %v322 = vstv %s321
    %v323 = vadd.s32 %v320, %v322
    %vm324 = vcmp.lt.s32.totalorder %v323, 2
    %v325 = vsel %vm324, %v289, 0.0
    %v326 = vrot.slane %v325, 4
    %v327 = vadd.f32 %v325, %v326
    %v328 = vrot.slane %v327, 2
    %v329 = vadd.f32 %v327, %v328
    %v330 = vrot.slane %v329, 1
    %v331 = vadd.f32 %v329, %v330
    %332 = vst [vmem:[#allocation11] sm:$0xff] %v331
    // Predicated region
    $region46: #{tpu_custom_call.1} parent=1 // pred_check
      _
    $region47: #{tpu_custom_call.1} parent=1 // pred_check_branch
      %334 = sbr.rel (0) target = $region49
    $region48: #{tpu_custom_call.1} parent=1 // pred_region
      %336 = vsyncadd [#allocation4], 48
      %s337 = sshll.u32 [#allocation10], 4
      %s338 = int_to_ptr.vmem [resolvable:$true] %s337
      %s339 = sshll.u32 %s7, 4
      %s340 = int_to_ptr.hbm [resolvable:$true] %s339
      %345 = dma.vmem_to_hbm [thread:$0]  %s338, 16, %s340, [#allocation4], 16, 16, 1
    $region49: #{tpu_custom_call.1} parent=1 // pred_fallthru
      _
    // Predicated region
    $region50: #{tpu_custom_call.1} parent=1 // pred_check
      _
    $region51: #{tpu_custom_call.1} parent=1 // pred_check_branch
      %347 = sbr.rel (0) target = $region53
    $region52: #{tpu_custom_call.1} parent=1 // pred_region
      %349 = vsyncadd [#allocation12], 0
      %s351 = sshll.u32 [#allocation11], 4
      %s352 = int_to_ptr.vmem [resolvable:$true] %s351
      %s353 = sshll.u32 %s8, 4
      %s354 = int_to_ptr.hbm [resolvable:$true] %s353
      %356 = dma.vmem_to_hbm [thread:$0]  %s352, 128, %s354, [#allocation12]
    $region53: #{tpu_custom_call.1} parent=1 // pred_fallthru
      _
    // Predicated region
    $region54: #{tpu_custom_call.1} parent=1 // pred_check
      _
    $region55: #{tpu_custom_call.1} parent=1 // pred_check_branch
      %358 = sbr.rel (0) target = $region57
    $region56: #{tpu_custom_call.1} parent=1 // pred_region
      %360 = dma.done [#allocation4], 64
    $region57: #{tpu_custom_call.1} parent=1 // pred_fallthru
      _
    // Predicated region
    $region58: #{tpu_custom_call.1} parent=1 // pred_check
      _
    $region59: #{tpu_custom_call.1} parent=1 // pred_check_branch
      %362 = sbr.rel (0) target = $region61
    $region60: #{tpu_custom_call.1} parent=1 // pred_region
      %364 = dma.done [#allocation12], 128
    $region61: #{tpu_custom_call.1} parent=1 // pred_fallthru
      _
    %365 = vsyncpa [#allocation3], 1
    %366 = vsyncpa [#allocation6], 1
    %367 = vsyncpa [#allocation9], 1
    %368 = vsyncpa [#allocation4], 1
    %369 = vsyncpa [#allocation12], 1

</llo_original>
